<compile_context>
chip_gen: v5e
topology: v5e:2x2
jax: 0.10.0
libtpu: 0.0.40
codegen_flags: <defaults>
</compile_context>

<pallas_src>
import jax
import jax.numpy as jnp
from jax.experimental import pallas as pl
from jax.experimental.pallas import tpu as pltpu


def end_kernel(w_ref, b_ref, x_ref, o_ref):
    # w_ref: (C_out, C_in)       resident across the grid (constant index_map)
    # b_ref: (C_out, 1)          resident
    # x_ref: (nb, C_in, t_hw)    nb batch elements, one spatial slab
    # o_ref: (nb, C_out, t_hw)   lane-dense output block
    w = w_ref[...]
    b = b_ref[...]
    nb = x_ref.shape[0]
    for n in range(nb):                                   # static unroll, nb <= 8
        # Reoriented matmul: W(C_out,C_in) @ X(C_in,t_hw) -> spatial dim on lanes.
        y = jnp.dot(w, x_ref[n], preferred_element_type=jnp.float32)
        y = y + b                                         # bias broadcast over lanes
        # sigmoid(y) = 0.5*tanh(0.5*y) + 0.5  (single EUP op, no divide)
        o_ref[n] = (0.5 * jnp.tanh(0.5 * y) + 0.5).astype(o_ref.dtype)


def end_forward(img, weight, bias, *, t_hw_target=131072, nb_max=8):
    """img: (N, C_in, H, W).  weight: (C_out, C_in).  bias: (C_out,)."""
    N, C_in, H, W = img.shape
    C_out = weight.shape[0]
    HW = H * W

    # Free reshape (no transpose): NCHW -> (N, C_in, H*W).
    x = img.reshape(N, C_in, HW)
    w = weight.astype(jnp.float32)                        # (C_out, C_in)
    b2 = bias.astype(jnp.float32).reshape(C_out, 1)       # (C_out, 1)

    # --- Tile sizing (memory-bound: maximize bytes per grid step) ------------
    bytes_per_col = 4 * (C_in + C_out)                    # f32 in + out per column
    # Cap: keep double-buffered in+out footprint < ~24 MiB (v7x 64 MiB VMEM safe).
    cols_cap = max(128, (((12 << 20) // bytes_per_col) // 128) * 128)
    # Goal: >= ~6 MiB of in+out bytes per step to amortize per-step overhead.
    cols_goal = max(128, (6 << 20) // bytes_per_col)

    hw_block = pl.cdiv(HW, 128) * 128                     # lane-aligned cover of HW
    t_hw = max(128, min(hw_block, (t_hw_target // 128) * 128, cols_cap))

    # When one spatial tile already covers the image, pack batch elements too.
    nb = 1
    if t_hw >= hw_block:
        nb = int(min(N, nb_max, max(1, cols_goal // t_hw), max(1, cols_cap // t_hw)))
        nb = max(1, nb)

    grid = (pl.cdiv(N, nb), pl.cdiv(HW, t_hw))            # ragged sizes -> partial
                                                          # blocks masked by Pallas

    block_bytes = bytes_per_col * nb * t_hw               # in + out per grid step
    vmem_limit = int(min(96 << 20, max(32 << 20, 2 * block_bytes + (2 << 20))))

    cost = pl.CostEstimate(
        flops=2 * N * HW * C_in * C_out,
        transcendentals=N * HW * C_out,                   # one tanh per output elem
        bytes_accessed=4 * (N * HW * (C_in + C_out) + C_out * (C_in + 1)),
    )

    out_flat = pl.pallas_call(
        end_kernel,
        out_shape=jax.ShapeDtypeStruct((N, C_out, HW), img.dtype),
        grid_spec=pltpu.PrefetchScalarGridSpec(
            num_scalar_prefetch=0,
            grid=grid,
            in_specs=[
                pl.BlockSpec((C_out, C_in), lambda i, j: (0, 0)),        # weight (resident)
                pl.BlockSpec((C_out, 1), lambda i, j: (0, 0)),           # bias   (resident)
                pl.BlockSpec((nb, C_in, t_hw), lambda i, j: (i, 0, j)),  # input slab
            ],
            out_specs=pl.BlockSpec((nb, C_out, t_hw), lambda i, j: (i, 0, j)),
        ),
        compiler_params=pltpu.CompilerParams(
            dimension_semantics=("parallel", "parallel"),
            vmem_limit_bytes=vmem_limit,
        ),
        cost_estimate=cost,
    )(w, b2, x)

    # Free reshape back: (N, C_out, H*W) -> NCHW.
    return out_flat.reshape(N, C_out, H, W)


def reference_forward(img, weight, bias):
    # Pure-JAX reference of Conv2d(k=1, s=1) + Sigmoid.
    y = jnp.einsum("nchw,oc->nohw", img, weight) + bias[None, :, None, None]
    return jax.nn.sigmoid(y)


if __name__ == "__main__":
    key = jax.random.PRNGKey(0)
    k_img, k_w, k_b = jax.random.split(key, 3)

    N, C_in, C_out, Hs, Ws = 2, 4, 8, 16, 16
    img = jax.random.normal(k_img, (N, C_in, Hs, Ws), dtype=jnp.float32)
    # Deterministic synthetic parameters (shapes match nn.Conv2d(C_in, C_out, 1, 1)).
    weight = jax.random.normal(k_w, (C_out, C_in), dtype=jnp.float32) * 0.1
    bias = jax.random.normal(k_b, (C_out,), dtype=jnp.float32) * 0.1

    out = jax.block_until_ready(end_forward(img, weight, bias))
    ref = reference_forward(img, weight, bias)
    assert out.shape == (N, C_out, Hs, Ws)
    assert jnp.allclose(out, ref, atol=1e-5, rtol=1e-5)

    # Awkward spatial size exercises the partial-block (masked tail) path.
    img2 = jax.random.normal(k_img, (N, C_in, 10, 13), dtype=jnp.float32)
    out2 = jax.block_until_ready(end_forward(img2, weight, bias))
    ref2 = reference_forward(img2, weight, bias)
    assert out2.shape == (N, C_out, 10, 13)
    assert jnp.allclose(out2, ref2, atol=1e-5, rtol=1e-5)

    print("KERNEL_OK")
</pallas_src>

<mosaic_0001>
module attributes {stable_mosaic.version = 11 : i64} {
  func.func @end_kernel(%arg0: i32, %arg1: i32, %arg2: memref<8x4xf32, #tpu.memory_space<vmem>>, %arg3: memref<8x1xf32, #tpu.memory_space<vmem>>, %arg4: memref<2x4x256xf32, #tpu.memory_space<vmem>>, %arg5: memref<2x8x256xf32, #tpu.memory_space<vmem>>) attributes {dimension_semantics = [#tpu.dimension_semantics<parallel>, #tpu.dimension_semantics<parallel>], iteration_bounds = array<i64: 1, 1>, scalar_prefetch = 0 : i64, scratch_operands = 0 : i64, tpu.core_type = #tpu.core_type<tc>, window_params = [{pipeline_mode = #tpu.pipeline_mode<synchronous>, transform_indices = @transform_0, window_bounds = array<i64: 8, 4>}, {pipeline_mode = #tpu.pipeline_mode<synchronous>, transform_indices = @transform_1, window_bounds = array<i64: 8, 1>}, {transform_indices = @transform_2, window_bounds = array<i64: 2, 4, 256>}, {transform_indices = @transform_3, window_bounds = array<i64: 2, 8, 256>}]} {
    %c0 = arith.constant 0 : index
    %c0_0 = arith.constant 0 : index
    %0 = vector.load %arg2[%c0, %c0_0] : memref<8x4xf32, #tpu.memory_space<vmem>>, vector<8x4xf32>
    %c0_1 = arith.constant 0 : index
    %c0_2 = arith.constant 0 : index
    %1 = vector.load %arg3[%c0_1, %c0_2] : memref<8x1xf32, #tpu.memory_space<vmem>>, vector<8x1xf32>
    %c0_3 = arith.constant 0 : index
    %c0_4 = arith.constant 0 : index
    %c0_5 = arith.constant 0 : index
    %2 = vector.load %arg4[%c0_3, %c0_4, %c0_5] : memref<2x4x256xf32, #tpu.memory_space<vmem>>, vector<1x4x256xf32>
    %3 = vector.shape_cast %2 : vector<1x4x256xf32> to vector<4x256xf32>
    %cst = arith.constant dense<0.000000e+00> : vector<8x256xf32>
    %4 = tpu.matmul %0, %3, %cst {dimension_numbers = #tpu.dot_dimension_numbers<[1], [0], [0], [1], [0, 0, 1, 1], [], []>} : vector<8x4xf32>, vector<4x256xf32>, vector<8x256xf32> -> vector<8x256xf32>
    %5 = vector.broadcast %1 : vector<8x1xf32> to vector<8x256xf32>
    %6 = arith.addf %4, %5 : vector<8x256xf32>
    %cst_6 = arith.constant 5.000000e-01 : f32
    %7 = vector.broadcast %cst_6 : f32 to vector<8x256xf32>
    %8 = arith.mulf %7, %6 : vector<8x256xf32>
    %9 = math.tanh %8 : vector<8x256xf32>
    %cst_7 = arith.constant 5.000000e-01 : f32
    %10 = vector.broadcast %cst_7 : f32 to vector<8x256xf32>
    %11 = arith.mulf %10, %9 : vector<8x256xf32>
    %cst_8 = arith.constant 5.000000e-01 : f32
    %12 = vector.broadcast %cst_8 : f32 to vector<8x256xf32>
    %13 = arith.addf %11, %12 : vector<8x256xf32>
    %c0_9 = arith.constant 0 : index
    %c0_10 = arith.constant 0 : index
    %c0_11 = arith.constant 0 : index
    %14 = vector.load %arg5[%c0_9, %c0_10, %c0_11] : memref<2x8x256xf32, #tpu.memory_space<vmem>>, vector<1x8x256xf32>
    %15 = vector.shape_cast %14 : vector<1x8x256xf32> to vector<8x256xf32>
    %16 = vector.shape_cast %13 : vector<8x256xf32> to vector<1x8x256xf32>
    tpu.vector_store %arg5[%c0_9, %c0_10, %c0_11], %16 {strides = array<i32>} : memref<2x8x256xf32, #tpu.memory_space<vmem>>, vector<1x8x256xf32>,
    %c1 = arith.constant 1 : index
    %c0_12 = arith.constant 0 : index
    %c0_13 = arith.constant 0 : index
    %17 = vector.load %arg4[%c1, %c0_12, %c0_13] : memref<2x4x256xf32, #tpu.memory_space<vmem>>, vector<1x4x256xf32>
    %18 = vector.shape_cast %17 : vector<1x4x256xf32> to vector<4x256xf32>
    %cst_14 = arith.constant dense<0.000000e+00> : vector<8x256xf32>
    %19 = tpu.matmul %0, %18, %cst_14 {dimension_numbers = #tpu.dot_dimension_numbers<[1], [0], [0], [1], [0, 0, 1, 1], [], []>} : vector<8x4xf32>, vector<4x256xf32>, vector<8x256xf32> -> vector<8x256xf32>
    %20 = vector.broadcast %1 : vector<8x1xf32> to vector<8x256xf32>
    %21 = arith.addf %19, %20 : vector<8x256xf32>
    %cst_15 = arith.constant 5.000000e-01 : f32
    %22 = vector.broadcast %cst_15 : f32 to vector<8x256xf32>
    %23 = arith.mulf %22, %21 : vector<8x256xf32>
    %24 = math.tanh %23 : vector<8x256xf32>
    %cst_16 = arith.constant 5.000000e-01 : f32
    %25 = vector.broadcast %cst_16 : f32 to vector<8x256xf32>
    %26 = arith.mulf %25, %24 : vector<8x256xf32>
    %cst_17 = arith.constant 5.000000e-01 : f32
    %27 = vector.broadcast %cst_17 : f32 to vector<8x256xf32>
    %28 = arith.addf %26, %27 : vector<8x256xf32>
    %c1_18 = arith.constant 1 : index
    %c0_19 = arith.constant 0 : index
    %c0_20 = arith.constant 0 : index
    %29 = vector.load %arg5[%c1_18, %c0_19, %c0_20] : memref<2x8x256xf32, #tpu.memory_space<vmem>>, vector<1x8x256xf32>
    %30 = vector.shape_cast %29 : vector<1x8x256xf32> to vector<8x256xf32>
    %31 = vector.shape_cast %28 : vector<8x256xf32> to vector<1x8x256xf32>
    tpu.vector_store %arg5[%c1_18, %c0_19, %c0_20], %31 {strides = array<i32>} : memref<2x8x256xf32, #tpu.memory_space<vmem>>, vector<1x8x256xf32>,
    return
  }
  func.func @transform_0(%arg0: i32, %arg1: i32) -> (i32, i32) {
    %c0_i32 = arith.constant 0 : i32
    %c0_i32_0 = arith.constant 0 : i32
    %c0_i32_1 = arith.constant 0 : i32
    return %c0_i32, %c0_i32_0 : i32, i32
  }
  func.func @transform_1(%arg0: i32, %arg1: i32) -> (i32, i32) {
    %c0_i32 = arith.constant 0 : i32
    %c0_i32_0 = arith.constant 0 : i32
    %c0_i32_1 = arith.constant 0 : i32
    return %c0_i32, %c0_i32_0 : i32, i32
  }
  func.func @transform_2(%arg0: i32, %arg1: i32) -> (i32, i32, i32) {
    %c0_i32 = arith.constant 0 : i32
    %c0_i32_0 = arith.constant 0 : i32
    return %arg0, %c0_i32, %arg1 : i32, i32, i32
  }
  func.func @transform_3(%arg0: i32, %arg1: i32) -> (i32, i32, i32) {
    %c0_i32 = arith.constant 0 : i32
    %c0_i32_0 = arith.constant 0 : i32
    return %arg0, %c0_i32, %arg1 : i32, i32, i32
  }
}

</mosaic_0001>

<llo_original>
// kernel: tpu_custom_call.1
$region0: #{tpu_custom_call.1}
  #allocation0 [shape = 'u32[]', space=smem, size = 0x4, offset = 0x4, fixed_abs, tag = 'smem constant byte address 0x4 - core index']
  #allocation1 [shape = 'u32[72,128]{1,0:T(1,128)}', space=vmem, size = 0x9000, scoped, tag = 'internal scratch']
  %s0 = inlined_call_operand.vmem [shape: f32[8,4], index: 0, kind: input, shape index: {}]
  %s1 = inlined_call_operand.vmem [shape: f32[8,1], index: 1, kind: input, shape index: {}]
  %s2 = inlined_call_operand.vmem [shape: f32[2,4,256], index: 2, kind: input, shape index: {}]
  %s3 = inlined_call_operand.hbm [shape: f32[2,8,256], index: 3, kind: output, shape index: {}]
  %s4 = sld [smem:[#allocation0]]
  $region22: #{tpu_custom_call.1} parent=0
    _
  %s6 = ssub.s32 1, %s4
  %s7 = scalar_select 0, %s6, %s4
  $region1: #{tpu_custom_call.1} parent=0
    #allocation2 [shape = 'u8[16384]{0}', space=vmem, size = 0x4000, scoped, tag = 'output window, operand 0, single buffered']
    #allocation3 [shape = 's32[1]{0}', space=sflag, size = 0x4, scoped, tag = 'scoped memory for tpu_custom_call.1']
    %8 = vsyncpa [#allocation3], 0
    // Predicated region
    $region2: #{tpu_custom_call.1} parent=1 // pred_check
      _
    $region3: #{tpu_custom_call.1} parent=1 // pred_check_branch
      %10 = sbr.rel (0) target = $region5
    $region4: #{tpu_custom_call.1} parent=1 // pred_region
      _
    $region5: #{tpu_custom_call.1} parent=1 // pred_fallthru
      _
    // Predicated region
    $region6: #{tpu_custom_call.1} parent=1 // pred_check
      _
    $region7: #{tpu_custom_call.1} parent=1 // pred_check_branch
      %12 = sbr.rel (0) target = $region9
    $region8: #{tpu_custom_call.1} parent=1 // pred_region
      _
    $region9: #{tpu_custom_call.1} parent=1 // pred_fallthru
      _
    // Predicated region
    $region10: #{tpu_custom_call.1} parent=1 // pred_check
      _
    $region11: #{tpu_custom_call.1} parent=1 // pred_check_branch
      %14 = sbr.rel (0) target = $region13
    $region12: #{tpu_custom_call.1} parent=1 // pred_region
      _
    $region13: #{tpu_custom_call.1} parent=1 // pred_fallthru
      _
    %v15 = vld [vmem:[%s0] sm:$0xff]
    %v16 = vld [vmem:[%s1] sm:$0xff]
    %v17 = vld [vmem:[%s2] sm:$0xff]
    %19 = vset.pattern.permute.xlu0 0
    %20 = vperm.xlu0 %19, %v16
    %v21 = vpop.permute.xlu0 %20
    %24 = vst [vmem:[#allocation1] ss:$2 sm:$0xff] %v17
    %v25 = vld.sshfl [vmem:[#allocation1] sm:$0xff pattern:$0x75316420]
    %v26 = vld.sshfl [vmem:[#allocation1 + $0x8] sm:$0xff pattern:$0x75316420]
    %vm27 = vcmask 31744
    %v29 = vsel %vm27, %v15, 0
    %vm31 = vcmask 1043456
    %v32 = vsel %vm31, %v25, 0
    %v34 = vsel %vm31, %v26, 0
    %36 = vmatpush.msra.mxu0 0.0
    %37 = vmatpush.msra.mxu0 0.0
    %38 = vmatpush.msra.mxu0 0.0
    %39 = vmatpush.msra.mxu0 0.0
    %40 = vmatpush.msra.mxu0 0.0
    %41 = vmatpush.msra.mxu0 0.0
    %42 = vmatpush.msra.mxu0 0.0
    %43 = vmatpush.msra.mxu0 0.0
    %44 = vmatpush.msra.mxu0 0.0
    %45 = vmatpush.msra.mxu0 0.0
    %46 = vmatpush.msra.mxu0 0.0
    %47 = vmatpush.msra.mxu0 0.0
    %48 = vmatpush.msra.mxu0 0.0
    %49 = vmatpush.msra.mxu0 0.0
    %50 = vmatpush.msra.mxu0 0.0
    %51 = vmatpush.msra.mxu0 %v32
    %52 = vmatmul.f32.gmra.mxu0 %v29
    %v53 = vpop.f32.mrf.mxu0
    %v54 = vadd.f32 %v21, %v53
    %55 = vdwg.mxu0
    %56 = vmatpush.msra.mxu0 0.0
    %57 = vmatpush.msra.mxu0 0.0
    %58 = vmatpush.msra.mxu0 0.0
    %59 = vmatpush.msra.mxu0 0.0
    %60 = vmatpush.msra.mxu0 0.0
    %61 = vmatpush.msra.mxu0 0.0
    %62 = vmatpush.msra.mxu0 0.0
    %63 = vmatpush.msra.mxu0 0.0
    %64 = vmatpush.msra.mxu0 0.0
    %65 = vmatpush.msra.mxu0 0.0
    %66 = vmatpush.msra.mxu0 0.0
    %67 = vmatpush.msra.mxu0 0.0
    %68 = vmatpush.msra.mxu0 0.0
    %69 = vmatpush.msra.mxu0 0.0
    %70 = vmatpush.msra.mxu0 0.0
    %71 = vmatpush.msra.mxu0 %v34
    %72 = vmatmul.f32.gmra.mxu0 %v29
    %v73 = vpop.f32.mrf.mxu0
    %v74 = vadd.f32 %v21, %v73
    %75 = vdwg.mxu0
    %v76 = vmul.f32 %v54, 0.5
    %v77 = vmul.f32 %v74, 0.5
    %v78 = vtanh.pop %v76
    %v79 = vtanh.pop %v77
    %v80 = vmul.f32 %v78, 0.5
    %v81 = vmul.f32 %v79, 0.5
    %v82 = vadd.f32 %v80, 0.5
    %v83 = vadd.f32 %v81, 0.5
    %84 = vst [vmem:[#allocation2] sm:$0xff] %v82
    %85 = vst [vmem:[#allocation2 + $0x8] sm:$0xff] %v83
    %s86 = scalar_lea.vmem %s2, 8
    %v87 = vld [vmem:[%s86] sm:$0xff]
    %89 = vst [vmem:[#allocation1] ss:$2 sm:$0xff] %v87
    %v90 = vld.sshfl [vmem:[#allocation1] sm:$0xff pattern:$0x75316420]
    %v91 = vld.sshfl [vmem:[#allocation1 + $0x8] sm:$0xff pattern:$0x75316420]
    %v92 = vsel %vm31, %v90, 0
    %v94 = vsel %vm31, %v91, 0
    %96 = vmatpush.msra.mxu0 0.0
    %97 = vmatpush.msra.mxu0 0.0
    %98 = vmatpush.msra.mxu0 0.0
    %99 = vmatpush.msra.mxu0 0.0
    %100 = vmatpush.msra.mxu0 0.0
    %101 = vmatpush.msra.mxu0 0.0
    %102 = vmatpush.msra.mxu0 0.0
    %103 = vmatpush.msra.mxu0 0.0
    %104 = vmatpush.msra.mxu0 0.0
    %105 = vmatpush.msra.mxu0 0.0
    %106 = vmatpush.msra.mxu0 0.0
    %107 = vmatpush.msra.mxu0 0.0
    %108 = vmatpush.msra.mxu0 0.0
    %109 = vmatpush.msra.mxu0 0.0
    %110 = vmatpush.msra.mxu0 0.0
    %111 = vmatpush.msra.mxu0 %v92
    %112 = vmatmul.f32.gmra.mxu0 %v29
    %v113 = vpop.f32.mrf.mxu0
    %v114 = vadd.f32 %v21, %v113
    %115 = vdwg.mxu0
    %116 = vmatpush.msra.mxu0 0.0
    %117 = vmatpush.msra.mxu0 0.0
    %118 = vmatpush.msra.mxu0 0.0
    %119 = vmatpush.msra.mxu0 0.0
    %120 = vmatpush.msra.mxu0 0.0
    %121 = vmatpush.msra.mxu0 0.0
    %122 = vmatpush.msra.mxu0 0.0
    %123 = vmatpush.msra.mxu0 0.0
    %124 = vmatpush.msra.mxu0 0.0
    %125 = vmatpush.msra.mxu0 0.0
    %126 = vmatpush.msra.mxu0 0.0
    %127 = vmatpush.msra.mxu0 0.0
    %128 = vmatpush.msra.mxu0 0.0
    %129 = vmatpush.msra.mxu0 0.0
    %130 = vmatpush.msra.mxu0 0.0
    %131 = vmatpush.msra.mxu0 %v94
    %132 = vmatmul.f32.gmra.mxu0 %v29
    %v133 = vpop.f32.mrf.mxu0
    %v134 = vadd.f32 %v21, %v133
    %135 = vdwg.mxu0
    %v136 = vmul.f32 %v114, 0.5
    %v137 = vmul.f32 %v134, 0.5
    %v138 = vtanh.pop %v136
    %v139 = vtanh.pop %v137
    %v140 = vmul.f32 %v138, 0.5
    %v141 = vmul.f32 %v139, 0.5
    %v142 = vadd.f32 %v140, 0.5
    %v143 = vadd.f32 %v141, 0.5
    %s144 = scalar_lea.vmem [#allocation2], 16
    %145 = vst [vmem:[%s144] sm:$0xff] %v142
    %146 = vst [vmem:[%s144 + $0x8] sm:$0xff] %v143
    // Predicated region
    $region14: #{tpu_custom_call.1} parent=1 // pred_check
      _
    $region15: #{tpu_custom_call.1} parent=1 // pred_check_branch
      %148 = sbr.rel (0) target = $region17
    $region16: #{tpu_custom_call.1} parent=1 // pred_region
      %150 = vsyncadd [#allocation3], 0
      %s151 = sshll.u32 [#allocation2], 4
      %s152 = int_to_ptr.vmem [resolvable:$true] %s151
      %s153 = sshll.u32 %s3, 4
      %s154 = int_to_ptr.hbm [resolvable:$true] %s153
      %159 = dma.vmem_to_hbm [thread:$0]  %s152, 512, %s154, [#allocation3], 256, 256, 16
    $region17: #{tpu_custom_call.1} parent=1 // pred_fallthru
      _
    // Predicated region
    $region18: #{tpu_custom_call.1} parent=1 // pred_check
      _
    $region19: #{tpu_custom_call.1} parent=1 // pred_check_branch
      %161 = sbr.rel (0) target = $region21
    $region20: #{tpu_custom_call.1} parent=1 // pred_region
      %163 = dma.done [#allocation3], 512
    $region21: #{tpu_custom_call.1} parent=1 // pred_fallthru
      _
    %164 = vsyncpa [#allocation3], 1

</llo_original>
